<compile_context>
chip_gen: v7x
topology: tpu7x:2x2x1
jax: 0.10.0
libtpu: 0.0.40
codegen_flags: <defaults>
</compile_context>

<pallas_src>
import functools

import jax
import jax.numpy as jnp
from jax.experimental import pallas as pl
from jax.experimental.pallas import tpu as pltpu


def _ce_loss_kernel(logits_ref, tgt_ref, w_ref, loss_ref, wsum_ref, *,
                    ignore_index, hw):
    p = pl.program_id(1)

    # Output blocks are resident across the pixel-tile ("arbitrary") axis:
    # zero them at the first tile of each image.
    @pl.when(p == 0)
    def _():
        loss_ref[...] = jnp.zeros_like(loss_ref)
        wsum_ref[...] = jnp.zeros_like(wsum_ref)

    logits = logits_ref[...].astype(jnp.float32)       # (C, T)  pixels on lanes
    tgt = tgt_ref[...]                                  # (1, T)  int32
    wcol = w_ref[...].astype(jnp.float32)               # (C, 1)

    num_classes, tile_p = logits.shape

    # Numerically stable log-sum-exp over the (small) class / sublane axis.
    m = jnp.max(logits, axis=0, keepdims=True)                        # (1, T)
    lse = m + jnp.log(jnp.sum(jnp.exp(logits - m), axis=0, keepdims=True))

    # One-hot gather of target logit and the per-class weight.
    classes = jax.lax.broadcasted_iota(jnp.int32, (num_classes, tile_p), 0)
    one_hot = (classes == tgt).astype(jnp.float32)                    # (C, T)
    picked = jnp.sum(one_hot * logits, axis=0, keepdims=True)         # (1, T)
    w_px = jnp.sum(one_hot * wcol, axis=0, keepdims=True)             # (1, T)

    # Pixel validity: inside the real image (ragged tail of the last tile),
    # not ignore_index, and a representable class id.  jnp.where (a select)
    # keeps any garbage in the clipped tail from propagating NaN/Inf.
    pix = p * tile_p + jax.lax.broadcasted_iota(jnp.int32, (1, tile_p), 1)
    valid = ((pix < hw) & (tgt != ignore_index)
             & (tgt >= 0) & (tgt < num_classes))

    loss_ref[...] += jnp.where(valid, w_px * (lse - picked), 0.0)     # (1, T)
    wsum_ref[...] += jnp.where(valid, w_px, 0.0)                      # (1, T)


def criterion_dsn(preds, target, class_weight, *,
                  ignore_index=255, loss_weight=1.0, tile=4096):
    """Forward of CriterionDSN: weighted mean cross-entropy over all pixels.

    preds:  (N, C, H, W) float logits (NCHW, as in PyTorch); native dtype kept.
    target: (N, H, W)    int class ids (ignore_index == ignored pixel).
    class_weight: (C,)   float per-class weights.
    """
    # TODO(synk): the original module's __init__ also builds an (unweighted)
    # aux criterion gated on self.aux_classifier, but forward() only returns
    # criterion1(preds, target); loss_weight is unused there, so it is unused
    # here too.
    N, C, H, W = preds.shape
    assert preds.shape[2:] == target.shape[1:], \
        "preds[0] shape must be equality to target."

    HW = H * W

    # Free reshapes only — no transpose, no pad, no dtype upcast.
    logits = preds.reshape(N, C, HW)
    tgt = target.reshape(N, 1, HW).astype(jnp.int32)
    wcol = class_weight.reshape(C, 1).astype(jnp.float32)

    # Pixel tile: multiple of 128 lanes, clamped to the (rounded-up) image size.
    tile = max(128, (int(tile) // 128) * 128)
    tile_p = min(tile, pl.cdiv(HW, 128) * 128)
    n_tiles = pl.cdiv(HW, tile_p)

    kernel = functools.partial(_ce_loss_kernel,
                               ignore_index=ignore_index, hw=HW)

    loss_part, wsum_part = pl.pallas_call(
        kernel,
        out_shape=(
            jax.ShapeDtypeStruct((N, 1, tile_p), jnp.float32),  # per-image sum(w*nll) lanes
            jax.ShapeDtypeStruct((N, 1, tile_p), jnp.float32),  # per-image sum(w) lanes
        ),
        grid_spec=pltpu.PrefetchScalarGridSpec(
            num_scalar_prefetch=0,
            grid=(N, n_tiles),
            in_specs=[
                pl.BlockSpec((None, C, tile_p), lambda n, p: (n, 0, p)),  # logits
                pl.BlockSpec((None, 1, tile_p), lambda n, p: (n, 0, p)),  # targets
                pl.BlockSpec((C, 1), lambda n, p: (0, 0)),                # class weights
            ],
            out_specs=(
                pl.BlockSpec((None, 1, tile_p), lambda n, p: (n, 0, 0)),
                pl.BlockSpec((None, 1, tile_p), lambda n, p: (n, 0, 0)),
            ),
        ),
        compiler_params=pltpu.CompilerParams(
            dimension_semantics=("parallel", "arbitrary")),
    )(logits, tgt, wcol)

    # Tiny final reduction + divide in the wrapper (keeps the batch axis
    # megacore-parallel inside the kernel, and matches torch's 'mean').
    return jnp.sum(loss_part) / jnp.sum(wsum_part)


def _reference_loss(preds, target, class_weight, ignore_index=255):
    """Pure-JAX reference mirroring torch.nn.CrossEntropyLoss(weight, ignore_index, 'mean')."""
    N, C, H, W = preds.shape
    logits = jnp.transpose(preds, (0, 2, 3, 1)).reshape(-1, C).astype(jnp.float32)
    tgt = target.reshape(-1).astype(jnp.int32)
    valid = tgt != ignore_index
    tgt_safe = jnp.where(valid, tgt, 0)
    logp = jax.nn.log_softmax(logits, axis=-1)
    picked = jnp.take_along_axis(logp, tgt_safe[:, None], axis=-1)[:, 0]
    w = class_weight[tgt_safe]
    num = jnp.sum(jnp.where(valid, -w * picked, 0.0))
    den = jnp.sum(jnp.where(valid, w, 0.0))
    return num / den


if __name__ == "__main__":
    key = jax.random.PRNGKey(0)
    k1, k2, k3 = jax.random.split(key, 3)

    N, C, H, W = 2, 4, 16, 16
    preds = jax.random.normal(k1, (N, C, H, W), dtype=jnp.float32)
    target = jax.random.randint(k2, (N, H, W), 0, C, dtype=jnp.int32)
    # sprinkle some ignored pixels (ignore_index = 255)
    ignore_mask = jax.random.bernoulli(k3, 0.1, (N, H, W))
    target = jnp.where(ignore_mask, 255, target)

    # deterministic class weights (would normally come from the constructor)
    class_weight = jnp.array([1.0, 0.5, 2.0, 1.5], dtype=jnp.float32)

    loss = criterion_dsn(preds, target, class_weight,
                         ignore_index=255, loss_weight=1.0)
    loss = jax.block_until_ready(loss)

    ref = _reference_loss(preds, target, class_weight, ignore_index=255)
    assert jnp.allclose(loss, ref, rtol=1e-5, atol=1e-5), (loss, ref)

    print("KERNEL_OK")
</pallas_src>

<mosaic_0001>
module attributes {stable_mosaic.version = 11 : i64} {
  func.func @_ce_loss_kernel(%arg0: i32, %arg1: i32, %arg2: memref<1x4x256xf32, #tpu.memory_space<vmem>>, %arg3: memref<1x1x256xi32, #tpu.memory_space<vmem>>, %arg4: memref<4x1xf32, #tpu.memory_space<vmem>>, %arg5: memref<1x1x256xf32, #tpu.memory_space<vmem>>, %arg6: memref<1x1x256xf32, #tpu.memory_space<vmem>>) attributes {dimension_semantics = [#tpu.dimension_semantics<parallel>, #tpu.dimension_semantics<arbitrary>], iteration_bounds = array<i64: 2, 1>, scalar_prefetch = 0 : i64, scratch_operands = 0 : i64, tpu.core_type = #tpu.core_type<tc>, window_params = [{transform_indices = @transform_0, window_bounds = array<i64: 1, 4, 256>}, {transform_indices = @transform_1, window_bounds = array<i64: 1, 1, 256>}, {pipeline_mode = #tpu.pipeline_mode<synchronous>, transform_indices = @transform_2, window_bounds = array<i64: 4, 1>}, {transform_indices = @transform_3, window_bounds = array<i64: 1, 1, 256>}, {transform_indices = @transform_4, window_bounds = array<i64: 1, 1, 256>}]} {
    %c0_i32 = arith.constant 0 : i32
    %0 = arith.cmpi eq, %arg1, %c0_i32 : i32
    %1 = arith.extui %0 : i1 to i32
    %c0_i32_0 = arith.constant 0 : i32
    %2 = arith.cmpi ne, %1, %c0_i32_0 : i32
    scf.if %2 {
      %cst_27 = arith.constant 0.000000e+00 : f32
      %62 = vector.broadcast %cst_27 : f32 to vector<1x256xf32>
      %c0_28 = arith.constant 0 : index
      %c0_29 = arith.constant 0 : index
      %c0_30 = arith.constant 0 : index
      %63 = vector.load %arg5[%c0_28, %c0_29, %c0_30] : memref<1x1x256xf32, #tpu.memory_space<vmem>>, vector<1x1x256xf32>
      %64 = vector.shape_cast %63 : vector<1x1x256xf32> to vector<1x256xf32>
      %65 = vector.shape_cast %62 : vector<1x256xf32> to vector<1x1x256xf32>
      tpu.vector_store %arg5[%c0_28, %c0_29, %c0_30], %65 {strides = array<i32>} : memref<1x1x256xf32, #tpu.memory_space<vmem>>, vector<1x1x256xf32>,
      %cst_31 = arith.constant 0.000000e+00 : f32
      %66 = vector.broadcast %cst_31 : f32 to vector<1x256xf32>
      %c0_32 = arith.constant 0 : index
      %c0_33 = arith.constant 0 : index
      %c0_34 = arith.constant 0 : index
      %67 = vector.load %arg6[%c0_32, %c0_33, %c0_34] : memref<1x1x256xf32, #tpu.memory_space<vmem>>, vector<1x1x256xf32>
      %68 = vector.shape_cast %67 : vector<1x1x256xf32> to vector<1x256xf32>
      %69 = vector.shape_cast %66 : vector<1x256xf32> to vector<1x1x256xf32>
      tpu.vector_store %arg6[%c0_32, %c0_33, %c0_34], %69 {strides = array<i32>} : memref<1x1x256xf32, #tpu.memory_space<vmem>>, vector<1x1x256xf32>,
    } else {
    }
    %c0 = arith.constant 0 : index
    %c0_1 = arith.constant 0 : index
    %c0_2 = arith.constant 0 : index
    %3 = vector.load %arg2[%c0, %c0_1, %c0_2] : memref<1x4x256xf32, #tpu.memory_space<vmem>>, vector<1x4x256xf32>
    %4 = vector.shape_cast %3 : vector<1x4x256xf32> to vector<4x256xf32>
    %c0_3 = arith.constant 0 : index
    %c0_4 = arith.constant 0 : index
    %c0_5 = arith.constant 0 : index
    %5 = vector.load %arg3[%c0_3, %c0_4, %c0_5] : memref<1x1x256xi32, #tpu.memory_space<vmem>>, vector<1x1x256xi32>
    %6 = vector.shape_cast %5 : vector<1x1x256xi32> to vector<1x256xi32>
    %c0_6 = arith.constant 0 : index
    %c0_7 = arith.constant 0 : index
    %7 = vector.load %arg4[%c0_6, %c0_7] : memref<4x1xf32, #tpu.memory_space<vmem>>, vector<4x1xf32>
    %cst = arith.constant dense<0xFF800000> : vector<256xf32>
    %8 = vector.multi_reduction <maximumf>, %4, %cst [0] : vector<4x256xf32> to vector<256xf32>
    %9 = vector.shape_cast %8 : vector<256xf32> to vector<1x256xf32>
    %10 = vector.broadcast %9 : vector<1x256xf32> to vector<4x256xf32>
    %11 = arith.subf %4, %10 : vector<4x256xf32>
    %12 = math.exp %11 : vector<4x256xf32>
    %cst_8 = arith.constant dense<0.000000e+00> : vector<256xf32>
    %13 = vector.multi_reduction <add>, %12, %cst_8 [0] : vector<4x256xf32> to vector<256xf32>
    %14 = vector.shape_cast %13 : vector<256xf32> to vector<1x256xf32>
    %15 = math.log %14 : vector<1x256xf32>
    %16 = arith.addf %9, %15 : vector<1x256xf32>
    %17 = tpu.iota {dimensions = array<i32: 0>} : vector<4x256xi32>
    %18 = vector.broadcast %6 : vector<1x256xi32> to vector<4x256xi32>
    %19 = arith.cmpi eq, %17, %18 : vector<4x256xi32>
    %20 = arith.extui %19 : vector<4x256xi1> to vector<4x256xi32>
    %21 = arith.sitofp %20 : vector<4x256xi32> to vector<4x256xf32>
    %22 = arith.mulf %21, %4 : vector<4x256xf32>
    %cst_9 = arith.constant dense<0.000000e+00> : vector<256xf32>
    %23 = vector.multi_reduction <add>, %22, %cst_9 [0] : vector<4x256xf32> to vector<256xf32>
    %24 = vector.shape_cast %23 : vector<256xf32> to vector<1x256xf32>
    %25 = vector.broadcast %7 : vector<4x1xf32> to vector<4x256xf32>
    %26 = arith.mulf %21, %25 : vector<4x256xf32>
    %cst_10 = arith.constant dense<0.000000e+00> : vector<256xf32>
    %27 = vector.multi_reduction <add>, %26, %cst_10 [0] : vector<4x256xf32> to vector<256xf32>
    %28 = vector.shape_cast %27 : vector<256xf32> to vector<1x256xf32>
    %c256_i32 = arith.constant 256 : i32
    %29 = arith.muli %arg1, %c256_i32 : i32
    %30 = tpu.iota {dimensions = array<i32: 1>} : vector<1x256xi32>
    %31 = vector.broadcast %29 : i32 to vector<1x256xi32>
    %32 = arith.addi %31, %30 : vector<1x256xi32>
    %c256_i32_11 = arith.constant 256 : i32
    %33 = vector.broadcast %c256_i32_11 : i32 to vector<1x256xi32>
    %34 = arith.cmpi slt, %32, %33 : vector<1x256xi32>
    %c255_i32 = arith.constant 255 : i32
    %35 = vector.broadcast %c255_i32 : i32 to vector<1x256xi32>
    %36 = arith.cmpi ne, %6, %35 : vector<1x256xi32>
    %37 = arith.andi %34, %36 : vector<1x256xi1>
    %c0_i32_12 = arith.constant 0 : i32
    %38 = vector.broadcast %c0_i32_12 : i32 to vector<1x256xi32>
    %39 = arith.cmpi sge, %6, %38 : vector<1x256xi32>
    %40 = arith.andi %37, %39 : vector<1x256xi1>
    %c4_i32 = arith.constant 4 : i32
    %41 = vector.broadcast %c4_i32 : i32 to vector<1x256xi32>
    %42 = arith.cmpi slt, %6, %41 : vector<1x256xi32>
    %43 = arith.andi %40, %42 : vector<1x256xi1>
    %c0_13 = arith.constant 0 : index
    %c0_14 = arith.constant 0 : index
    %c0_15 = arith.constant 0 : index
    %44 = vector.load %arg5[%c0_13, %c0_14, %c0_15] : memref<1x1x256xf32, #tpu.memory_space<vmem>>, vector<1x1x256xf32>
    %45 = vector.shape_cast %44 : vector<1x1x256xf32> to vector<1x256xf32>
    %46 = arith.subf %16, %24 : vector<1x256xf32>
    %47 = arith.mulf %28, %46 : vector<1x256xf32>
    %cst_16 = arith.constant 0.000000e+00 : f32
    %48 = vector.broadcast %cst_16 : f32 to vector<1x256xf32>
    %49 = arith.select %43, %47, %48 : vector<1x256xi1>, vector<1x256xf32>
    %50 = arith.addf %45, %49 : vector<1x256xf32>
    %c0_17 = arith.constant 0 : index
    %c0_18 = arith.constant 0 : index
    %c0_19 = arith.constant 0 : index
    %51 = vector.load %arg5[%c0_17, %c0_18, %c0_19] : memref<1x1x256xf32, #tpu.memory_space<vmem>>, vector<1x1x256xf32>
    %52 = vector.shape_cast %51 : vector<1x1x256xf32> to vector<1x256xf32>
    %53 = vector.shape_cast %50 : vector<1x256xf32> to vector<1x1x256xf32>
    tpu.vector_store %arg5[%c0_17, %c0_18, %c0_19], %53 {strides = array<i32>} : memref<1x1x256xf32, #tpu.memory_space<vmem>>, vector<1x1x256xf32>,
    %c0_20 = arith.constant 0 : index
    %c0_21 = arith.constant 0 : index
    %c0_22 = arith.constant 0 : index
    %54 = vector.load %arg6[%c0_20, %c0_21, %c0_22] : memref<1x1x256xf32, #tpu.memory_space<vmem>>, vector<1x1x256xf32>
    %55 = vector.shape_cast %54 : vector<1x1x256xf32> to vector<1x256xf32>
    %cst_23 = arith.constant 0.000000e+00 : f32
    %56 = vector.broadcast %cst_23 : f32 to vector<1x256xf32>
    %57 = arith.select %43, %28, %56 : vector<1x256xi1>, vector<1x256xf32>
    %58 = arith.addf %55, %57 : vector<1x256xf32>
    %c0_24 = arith.constant 0 : index
    %c0_25 = arith.constant 0 : index
    %c0_26 = arith.constant 0 : index
    %59 = vector.load %arg6[%c0_24, %c0_25, %c0_26] : memref<1x1x256xf32, #tpu.memory_space<vmem>>, vector<1x1x256xf32>
    %60 = vector.shape_cast %59 : vector<1x1x256xf32> to vector<1x256xf32>
    %61 = vector.shape_cast %58 : vector<1x256xf32> to vector<1x1x256xf32>
    tpu.vector_store %arg6[%c0_24, %c0_25, %c0_26], %61 {strides = array<i32>} : memref<1x1x256xf32, #tpu.memory_space<vmem>>, vector<1x1x256xf32>,
    return
  }
  func.func @transform_0(%arg0: i32, %arg1: i32) -> (i32, i32, i32) {
    %c0_i32 = arith.constant 0 : i32
    %c0_i32_0 = arith.constant 0 : i32
    return %arg0, %c0_i32, %arg1 : i32, i32, i32
  }
  func.func @transform_1(%arg0: i32, %arg1: i32) -> (i32, i32, i32) {
    %c0_i32 = arith.constant 0 : i32
    %c0_i32_0 = arith.constant 0 : i32
    return %arg0, %c0_i32, %arg1 : i32, i32, i32
  }
  func.func @transform_2(%arg0: i32, %arg1: i32) -> (i32, i32) {
    %c0_i32 = arith.constant 0 : i32
    %c0_i32_0 = arith.constant 0 : i32
    %c0_i32_1 = arith.constant 0 : i32
    return %c0_i32, %c0_i32_0 : i32, i32
  }
  func.func @transform_3(%arg0: i32, %arg1: i32) -> (i32, i32, i32) {
    %c0_i32 = arith.constant 0 : i32
    %c0_i32_0 = arith.constant 0 : i32
    %c0_i32_1 = arith.constant 0 : i32
    return %arg0, %c0_i32, %c0_i32_0 : i32, i32, i32
  }
  func.func @transform_4(%arg0: i32, %arg1: i32) -> (i32, i32, i32) {
    %c0_i32 = arith.constant 0 : i32
    %c0_i32_0 = arith.constant 0 : i32
    %c0_i32_1 = arith.constant 0 : i32
    return %arg0, %c0_i32, %c0_i32_0 : i32, i32, i32
  }
}

</mosaic_0001>

<llo_original>
// kernel: tpu_custom_call.1
$region0: #{tpu_custom_call.1}
  #allocation0 [shape = 'u32[]', space=smem, size = 0x4, offset = 0x4, fixed_abs, tag = 'smem constant byte address 0x4 - core index']
  #allocation1 [shape = 'u32[144,128]{1,0:T(1,128)}', space=vmem, size = 0x12000, scoped, tag = 'internal scratch']
  %s0 = inlined_call_operand.hbm [shape: f32[2,4,256], index: 0, kind: input, shape index: {}]
  %s1 = inlined_call_operand.vmem [shape: s32[2,1,256], index: 1, kind: input, shape index: {}]
  %s2 = inlined_call_operand.vmem [shape: f32[4,1], index: 2, kind: input, shape index: {}]
  %s3 = inlined_call_operand.hbm [shape: f32[2,1,256], index: 3, kind: output, shape index: {0}]
  %s4 = inlined_call_operand.hbm [shape: f32[2,1,256], index: 4, kind: output, shape index: {1}]
  %5 = xla_tuple %s3, %s4
  %s6 = sld [smem:[#allocation0]]
  $region61: #{tpu_custom_call.1} parent=0
    _
  %s8 = ssub.s32 1, %s6
  %s9 = scalar_select 0, %s8, %s6
  $region1: #{tpu_custom_call.1} parent=0
    #allocation2 [shape = 'u8[8192]{0}', space=vmem, size = 0x2000, scoped, tag = 'input window, operand 0']
    #allocation3 [shape = 's32[2]{0}', space=sflag, size = 0x8, scoped, tag = 'scoped memory for tpu_custom_call.1']
    #allocation4 [shape = 's32[2]{0}', space=sflag, size = 0x8, scoped, tag = 'scoped memory for tpu_custom_call.1']
    #allocation5 [shape = 'u8[2048]{0}', space=vmem, size = 0x800, scoped, tag = 'output window, operand 0']
    #allocation6 [shape = 'u8[2048]{0}', space=vmem, size = 0x800, scoped, tag = 'output window, operand 1']
    #allocation7 [shape = 's32[2]{0}', space=sflag, size = 0x8, scoped, tag = 'scoped memory for tpu_custom_call.1']
    %10 = vsyncpa [#allocation3], 0
    %s11 = scalar_lea.sflag [#allocation3], 1
    %12 = vsyncpa %s11, 0
    %13 = vsyncpa [#allocation4], 0
    %s14 = scalar_lea.sflag [#allocation4], 1
    %15 = vsyncpa %s14, 0
    %16 = vsyncpa [#allocation7], 0
    %s17 = scalar_lea.sflag [#allocation7], 1
    %18 = vsyncpa %s17, 0
    loop: start=0, step=1, limit=4
    $region2: #{tpu_custom_call.1} parent=1 // loop_pre_header
      _
    $region3: #{tpu_custom_call.1} parent=1 // loop_header
      %s20 = sphi 0, %s24
      %p21 = scmp.ge.s32.totalorder %s20, 4
      %s27 = sphi 0, %s39
      %s28 = sphi 0, %s35
      %s29 = sphi 0, %s27
      %s30 = sphi 0, %s28
      %s31 = sphi 0, %s29
      %s32 = sphi 0, %s30
      %s44 = sphi 0, %s46
      %s47 = sphi 0, %s44
      %s48 = sphi 0, %s47
      %s64 = sphi 0, %s48
      %s72 = sphi 0, %s74
      %s75 = sphi 0, %s72
      %s76 = sphi 0, %s75
      %s92 = sphi 0, %s76
      %s96 = sphi 0, %s96
      %s98 = sphi 0, %s96
      %s99 = sphi 0, %s98
      %s113 = sphi 0, %s99
      %s119 = sphi 0, %s121
      %s122 = sphi 0, %s119
      %s123 = sphi 0, %s122
      %s139 = sphi 0, %s123
      %s145 = sphi 0, %s147
      %s148 = sphi 0, %s145
      %s149 = sphi 0, %s148
      %s165 = sphi 0, %s149
    $region4: #{tpu_custom_call.1} parent=1 // loop_header_branch
      %23 = sbr.rel (%p21) target = $region8
    $region5: #{tpu_custom_call.1} parent=1 // loop_body
      %s25 = ssub.s32 %s20, 1
      %s26 = ssub.s32 %s20, 2
      %s33 = sadd.s32 1, %s28
      %p34 = scmp.ge.s32.totalorder %s33, 1
      %s35 = scalar_select %p34, 0, %s33
      %s36 = sadd.s32 1, %s27
      %s37 = scalar_select %p34, %s36, %s27
      %p38 = scmp.ge.s32.totalorder %s37, 2
      %s39 = scalar_select %p38, 0, %s37
      %s40 = ssub.s32 %s27, %s39
      %s41 = ssub.s32 %s28, %s35
      %s42 = sor.u32 %s40, %s41
      %p43 = scmp.eq.s32.totalorder %s42, 0
      %s45 = sadd.s32 %s44, 1
      %s46 = scalar_select %p43, %s44, %s45
      %p49 = pneg %p43
      %p50 = scmp.eq.s32.totalorder %s20, 1
      %p51 = por %p49, %p50
      %p52 = scmp.ne.s32.totalorder %s44, %s47
      %p53 = scmp.eq.s32.totalorder %s20, 0
      %p54 = por %p52, %p53
      %p55 = scmp.ne.s32.totalorder %s44, %s47
      %p56 = scmp.eq.s32.totalorder %s25, 1
      %p57 = por %p55, %p56
      %p58 = scmp.ne.s32.totalorder %s47, %s48
      %p59 = scmp.eq.s32.totalorder %s25, 0
      %p60 = por %p58, %p59
      %p61 = scmp.ne.s32.totalorder %s47, %s48
      %p62 = scmp.eq.s32.totalorder %s26, 1
      %p63 = por %p61, %p62
      %p65 = scmp.ne.s32.totalorder %s48, %s64
      %p66 = scmp.eq.s32.totalorder %s26, 0
      %p67 = por %p65, %p66
      %s68 = ssub.s32 %s27, %s39
      %s69 = ssub.s32 %s28, %s35
      %s70 = sor.u32 %s68, %s69
      %p71 = scmp.eq.s32.totalorder %s70, 0
      %s73 = sadd.s32 %s72, 1
      %s74 = scalar_select %p71, %s72, %s73
      %p77 = pneg %p71
      %p78 = scmp.eq.s32.totalorder %s20, 1
      %p79 = por %p77, %p78
      %p80 = scmp.ne.s32.totalorder %s72, %s75
      %p81 = scmp.eq.s32.totalorder %s20, 0
      %p82 = por %p80, %p81
      %p83 = scmp.ne.s32.totalorder %s72, %s75
      %p84 = scmp.eq.s32.totalorder %s25, 1
      %p85 = por %p83, %p84
      %p86 = scmp.ne.s32.totalorder %s75, %s76
      %p87 = scmp.eq.s32.totalorder %s25, 0
      %p88 = por %p86, %p87
      %p89 = scmp.ne.s32.totalorder %s75, %s76
      %p90 = scmp.eq.s32.totalorder %s26, 1
      %p91 = por %p89, %p90
      %p93 = scmp.ne.s32.totalorder %s76, %s92
      %p94 = scmp.eq.s32.totalorder %s26, 0
      %p95 = por %p93, %p94
      %s97 = sadd.s32 %s96, 1
      %p100 = scmp.eq.s32.totalorder %s20, 1
      %p101 = scmp.ne.s32.totalorder %s96, %s98
      %p102 = scmp.eq.s32.totalorder %s20, 0
      %p103 = por %p101, %p102
      %p104 = scmp.ne.s32.totalorder %s96, %s98
      %p105 = scmp.eq.s32.totalorder %s25, 1
      %p106 = por %p104, %p105
      %p107 = scmp.ne.s32.totalorder %s98, %s99
      %p108 = scmp.eq.s32.totalorder %s25, 0
      %p109 = por %p107, %p108
      %p110 = scmp.ne.s32.totalorder %s98, %s99
      %p111 = scmp.eq.s32.totalorder %s26, 1
      %p112 = por %p110, %p111
      %p114 = scmp.ne.s32.totalorder %s99, %s113
      %p115 = scmp.eq.s32.totalorder %s26, 0
      %p116 = por %p114, %p115
      %s117 = ssub.s32 %s27, %s39
      %p118 = scmp.eq.s32.totalorder %s117, 0
      %s120 = sadd.s32 %s119, 1
      %s121 = scalar_select %p118, %s119, %s120
      %p124 = pneg %p118
      %p125 = scmp.eq.s32.totalorder %s20, 1
      %p126 = por %p124, %p125
      %p127 = scmp.ne.s32.totalorder %s119, %s122
      %p128 = scmp.eq.s32.totalorder %s20, 0
      %p129 = por %p127, %p128
      %p130 = scmp.ne.s32.totalorder %s119, %s122
      %p131 = scmp.eq.s32.totalorder %s25, 1
      %p132 = por %p130, %p131
      %p133 = scmp.ne.s32.totalorder %s122, %s123
      %p134 = scmp.eq.s32.totalorder %s25, 0
      %p135 = por %p133, %p134
      %p136 = scmp.ne.s32.totalorder %s122, %s123
      %p137 = scmp.eq.s32.totalorder %s26, 1
      %p138 = por %p136, %p137
      %p140 = scmp.ne.s32.totalorder %s123, %s139
      %p141 = scmp.eq.s32.totalorder %s26, 0
      %p142 = por %p140, %p141
      %s143 = ssub.s32 %s27, %s39
      %p144 = scmp.eq.s32.totalorder %s143, 0
      %s146 = sadd.s32 %s145, 1
      %s147 = scalar_select %p144, %s145, %s146
      %p150 = pneg %p144
      %p151 = scmp.eq.s32.totalorder %s20, 1
      %p152 = por %p150, %p151
      %p153 = scmp.ne.s32.totalorder %s145, %s148
      %p154 = scmp.eq.s32.totalorder %s20, 0
      %p155 = por %p153, %p154
      %p156 = scmp.ne.s32.totalorder %s145, %s148
      %p157 = scmp.eq.s32.totalorder %s25, 1
      %p158 = por %p156, %p157
      %p159 = scmp.ne.s32.totalorder %s148, %s149
      %p160 = scmp.eq.s32.totalorder %s25, 0
      %p161 = por %p159, %p160
      %p162 = scmp.ne.s32.totalorder %s148, %s149
      %p163 = scmp.eq.s32.totalorder %s26, 1
      %p164 = por %p162, %p163
      %p166 = scmp.ne.s32.totalorder %s149, %s165
      %p167 = scmp.eq.s32.totalorder %s26, 0
      %p168 = por %p166, %p167
      %p169 = scmp.le.s32.totalorder 1, %s20
      %p170 = scmp.lt.s32.totalorder %s20, 3
      %p171 = pnand %p169, %p170
      %p172 = pneg %p171
      // Predicated region
      $region9: #{tpu_custom_call.1} parent=5 // pred_check
        _
      $region10: #{tpu_custom_call.1} parent=5 // pred_check_branch
        %174 = sbr.rel (%p171) target = $region12
      $region11: #{tpu_custom_call.1} parent=5 // pred_region
        %s175 = ssub.s32 %s20, 1
        // Predicated region
        $region13: #{tpu_custom_call.1} parent=11 // pred_check
          %p176 = pneg %p109
        $region14: #{tpu_custom_call.1} parent=11 // pred_check_branch
          %178 = sbr.rel (%p176) target = $region16
        $region15: #{tpu_custom_call.1} parent=11 // pred_region
          _
        $region16: #{tpu_custom_call.1} parent=11 // pred_fallthru
          _
      $region12: #{tpu_custom_call.1} parent=5 // pred_fallthru
        _
      %p179 = scmp.lt.s32.totalorder %s20, 2
      // Predicated region
      $region17: #{tpu_custom_call.1} parent=5 // pred_check
        %p180 = pneg %p179
      $region18: #{tpu_custom_call.1} parent=5 // pred_check_branch
        %182 = sbr.rel (%p180) target = $region20
      $region19: #{tpu_custom_call.1} parent=5 // pred_region
        // Predicated region
        $region21: #{tpu_custom_call.1} parent=19 // pred_check
          %p183 = pneg %p54
        $region22: #{tpu_custom_call.1} parent=19 // pred_check_branch
          %185 = sbr.rel (%p183) target = $region24
        $region23: #{tpu_custom_call.1} parent=19 // pred_region
          %s186 = sand.u32 %s44, 1
          %s187 = scalar_lea.sflag [#allocation3], %s186
          %s188 = sand.u32 %s44, 1
          %s189 = smul.addr %s188, 8
          %s190 = scalar_lea.vmem [#allocation2], %s189
          %s191 = smul.u32 2, %s28
          %s193 = ssub.s32 128, 128
          %194 = vsyncadd %s187, %s193
          %s195 = smul.addr %s27, 2
          %s196 = sadd.s32 %s191, %s195
          %s197 = smul.addr %s196, 64
          %s198 = scalar_lea.hbm %s0, %s197
          %s200 = sshll.u32 %s190, 4
          %s201 = int_to_ptr.vmem [resolvable:$true] %s200
          %203 = dma.hbm_to_vmem [thread:$0]  %s198, 128, %s201, %s187
        $region24: #{tpu_custom_call.1} parent=19 // pred_fallthru
          _
        // Predicated region
        $region25: #{tpu_custom_call.1} parent=19 // pred_check
          %p204 = pneg %p82
        $region26: #{tpu_custom_call.1} parent=19 // pred_check_branch
          %206 = sbr.rel (%p204) target = $region28
        $region27: #{tpu_custom_call.1} parent=19 // pred_region
          %s207 = smul.u32 2, %s28
          %p208 = scmp.lt.s32.totalorder %s27, 1
          %s209 = scalar_select %p208, %s27, 1
          %p210 = scmp.lt.s32.totalorder %s207, 1
          %s211 = scalar_select %p210, %s207, 1
          %s212 = smul.addr %s209, 2
          %s213 = sadd.s32 %s211, %s212
          %s214 = scalar_lea.vmem %s1, %s213
          %s215 = smul.u32 2, %s28
        $region28: #{tpu_custom_call.1} parent=19 // pred_fallthru
          _
      $region20: #{tpu_custom_call.1} parent=5 // pred_fallthru
        _
      %p216 = scmp.le.s32.totalorder 1, %s20
      %p217 = scmp.lt.s32.totalorder %s20, 3
      %p218 = pnand %p216, %p217
      %p219 = pneg %p218
      // Predicated region
      $region29: #{tpu_custom_call.1} parent=5 // pred_check
        _
      $region30: #{tpu_custom_call.1} parent=5 // pred_check_branch
        %221 = sbr.rel (%p218) target = $region32
      $region31: #{tpu_custom_call.1} parent=5 // pred_region
        %s222 = ssub.s32 %s20, 1
        %s223 = sand.u32 %s47, 1
        %s224 = scalar_lea.sflag [#allocation3], %s223
        %s225 = sand.u32 %s47, 1
        %s226 = smul.addr %s225, 8
        %s227 = scalar_lea.vmem [#allocation2], %s226
        // Predicated region
        $region33: #{tpu_custom_call.1} parent=31 // pred_check
          %p228 = pneg %p60
        $region34: #{tpu_custom_call.1} parent=31 // pred_check_branch
          %230 = sbr.rel (%p228) target = $region36
        $region35: #{tpu_custom_call.1} parent=31 // pred_region
          %231 = dma.done %s224, 128
        $region36: #{tpu_custom_call.1} parent=31 // pred_fallthru
          _
        %s232 = sand.u32 %s47, 1
        %s233 = scalar_lea.sflag [#allocation3], %s232
        %s234 = sand.u32 %s47, 1
        %s235 = smul.addr %s234, 8
        %s236 = scalar_lea.vmem [#allocation2], %s235
        %p237 = pneg %p60
        %p238 = pneg %p57
        %s239 = smul.u32 2, %s30
        %p240 = scmp.lt.s32.totalorder %s29, 1
        %s241 = scalar_select %p240, %s29, 1
        %p242 = scmp.lt.s32.totalorder %s239, 1
        %s243 = scalar_select %p242, %s239, 1
        %s244 = smul.addr %s241, 2
        %s245 = sadd.s32 %s243, %s244
        %s246 = scalar_lea.vmem %s1, %s245
        %p247 = pneg %p88
        %p248 = pneg %p85
        %p249 = pneg %p109
        %p250 = pneg %p106
        %p251 = pneg %p135
        %p252 = pneg %p132
        %s253 = sand.u32 %s122, 1
        %s254 = scalar_lea.sflag [#allocation4], %s253
        %s255 = sand.u32 %s122, 1
        %s256 = smul.addr %s255, 2
        %s257 = scalar_lea.vmem [#allocation5], %s256
        %p258 = pneg %p161
        %p259 = pneg %p158
        %s260 = sand.u32 %s148, 1
        %s261 = scalar_lea.sflag [#allocation7], %s260
        %s262 = sand.u32 %s148, 1
        %s263 = smul.addr %s262, 2
        %s264 = scalar_lea.vmem [#allocation6], %s263
        %s265 = smul.u32 2, %s30
        %s266 = smul.u32 2, %s30
        %p267 = scmp.lt.s32.totalorder %s29, 1
        %s268 = scalar_select %p267, %s29, 1
        %p269 = scmp.lt.s32.totalorder %s266, 1
        %s270 = scalar_select %p269, %s266, 1
        %s271 = smul.addr %s268, 2
        %s272 = sadd.s32 %s270, %s271
        %s273 = scalar_lea.vmem %s1, %s272
        %s274 = smul.u32 2, %s30
        %p275 = scmp.eq.s32.totalorder %s30, 0
        // Predicated region
        $region37: #{tpu_custom_call.1} parent=31 // pred_check
          %p276 = pneg %p275
        $region38: #{tpu_custom_call.1} parent=31 // pred_check_branch
          %278 = sbr.rel (%p276) target = $region40
        $region39: #{tpu_custom_call.1} parent=31 // pred_region
          %v279 = vlaneseq
          %vm280 = vcmp.ge.s32.totalorder %v279, 0
          %vm281 = vcmp.lt.s32.totalorder %v279, 256
          %vm282 = vmand %vm280, %vm281
          %283 = vst.msk [vmem:[%s257] sm:$0x3] %vm282, 0.0
          %284 = vst.msk [vmem:[%s264] sm:$0x3] %vm282, 0.0
        $region40: #{tpu_custom_call.1} parent=31 // pred_fallthru
          _
        %v285 = vld [vmem:[%s227] sm:$0xff]
        %v286 = vld [vmem:[%s273] sm:$0x3]
        %v287 = vld [vmem:[%s2] sm:$0xf]
        %v289 = vcombine.high %v285, %v285
        %vm291 = vcmask 1043456
        %v292 = vsel %vm291, %v285, -inf
        %v293 = vrot.slane %v292, 4
        %v294 = vmax.f32 %v292, %v293
        %v295 = vrot.slane %v294, 2
        %v296 = vmax.f32 %v294, %v295
        %v297 = vrot.slane %v296, 1
        %v298 = vmax.f32 %v296, %v297
        %v299 = vsel %vm291, %v289, -inf
        %v300 = vrot.slane %v299, 4
        %v301 = vmax.f32 %v299, %v300
        %v302 = vrot.slane %v301, 2
        %v303 = vmax.f32 %v301, %v302
        %v304 = vrot.slane %v303, 1
        %v305 = vmax.f32 %v303, %v304
        %v308 = vcombine.low %v298, %v305
        %v310 = vsub.f32 %v285, %v308
        %v311 = vmul.f32 %v310, 1.442695
        %v312 = vpow.pop %v311
        %v314 = vcombine.high %v312, %v312
        %v316 = vsel %vm291, %v312, 0.0
        %v317 = vrot.slane %v316, 4
        %v318 = vadd.f32 %v316, %v317
        %v319 = vrot.slane %v318, 2
        %v320 = vadd.f32 %v318, %v319
        %v321 = vrot.slane %v320, 1
        %v322 = vadd.f32 %v320, %v321
        %v323 = vsel %vm291, %v314, 0.0
        %v324 = vrot.slane %v323, 4
        %v325 = vadd.f32 %v323, %v324
        %v326 = vrot.slane %v325, 2
        %v327 = vadd.f32 %v325, %v326
        %v328 = vrot.slane %v327, 1
        %v329 = vadd.f32 %v327, %v328
        %v330 = vlog2.pop %v322
        %v331 = vmul.f32 %v330, 0.6931472
        %v332 = vlog2.pop %v329
        %v333 = vmul.f32 %v332, 0.6931472
        %v334 = vadd.f32 %v298, %v331
        %v335 = vadd.f32 %v305, %v333
        %v336 = vlaneseq
        %v337 = vshrl.u32 %v336, 7
        %v338 = vlaneseq
        %v339 = vshrl.u32 %v338, 7
        %v340 = vsub.s32 0, %v339
        %v341 = vrot.slane %v286, %v340
        %v342 = vlaneseq
        %v343 = vshrl.u32 %v342, 7
        %v344 = vsub.s32 1, %v343
        %v345 = vrot.slane %v286, %v344
        %vm346 = vcmp.eq.s32.totalorder %v337, %v341
        %vm347 = vcmp.eq.s32.totalorder %v337, %v345
        %v348 = vsel %vm346, 1, 0
        %v349 = vsel %vm347, 1, 0
        %v350 = vcvt.s32.f32 %v348
        %v351 = vcvt.s32.f32 %v349
        %v352 = vmul.f32 %v350, %v285
        %v353 = vmul.f32 %v351, %v289
        %v354 = vsel %vm291, %v352, 0.0
        %v355 = vrot.slane %v354, 4
        %v356 = vadd.f32 %v354, %v355
        %v357 = vrot.slane %v356, 2
        %v358 = vadd.f32 %v356, %v357
        %v359 = vrot.slane %v358, 1
        %v360 = vadd.f32 %v358, %v359
        %v361 = vsel %vm291, %v353, 0.0
        %v362 = vrot.slane %v361, 4
        %v363 = vadd.f32 %v361, %v362
        %v364 = vrot.slane %v363, 2
        %v365 = vadd.f32 %v363, %v364
        %v366 = vrot.slane %v365, 1
        %v367 = vadd.f32 %v365, %v366
        %369 = vset.pattern.permute.xlu0 0
        %370 = vperm.xlu0 %369, %v287
        %v371 = vpop.permute.xlu0 %370
        %v373 = vmul.f32 %v350, %v371
        %v374 = vmul.f32 %v351, %v371
        %v375 = vsel %vm291, %v373, 0.0
        %v376 = vrot.slane %v375, 4
        %v377 = vadd.f32 %v375, %v376
        %v378 = vrot.slane %v377, 2
        %v379 = vadd.f32 %v377, %v378
        %v380 = vrot.slane %v379, 1
        %v381 = vadd.f32 %v379, %v380
        %v382 = vsel %vm291, %v374, 0.0
        %v383 = vrot.slane %v382, 4
        %v384 = vadd.f32 %v382, %v383
        %v385 = vrot.slane %v384, 2
        %v386 = vadd.f32 %v384, %v385
        %v387 = vrot.slane %v386, 1
        %v388 = vadd.f32 %v386, %v387
        %s389 = smul.u32 %s30, 256
        %v390 = vlaneseq
        %v391 = vand.u32 %v390, 127
        %v392 = vadd.s32 %v391, 128
        %v393 = vstv %s389
        %v394 = vadd.s32 %v393, %v391
        %v395 = vadd.s32 %v393, %v392
        %vm396 = vcmp.lt.s32.totalorder %v394, 256
        %vm397 = vcmp.lt.s32.totalorder %v395, 256
        %vm398 = vcmp.ne.s32.totalorder %v286, 255
        %v399 = vsel %vm398, 1, 0
        %v400 = vlaneseq
        %v401 = vshrl.u32 %v400, 7
        %v402 = vsub.s32 0, %v401
        %v403 = vrot.slane %v399, %v402
        %v404 = vlaneseq
        %v405 = vshrl.u32 %v404, 7
        %v406 = vsub.s32 1, %v405
        %v407 = vrot.slane %v399, %v406
        %vm408 = vcmp.ne.s32.totalorder %v403, 0
        %vm409 = vcmp.ne.s32.totalorder %v407, 0
        %vm410 = vmand %vm396, %vm408
        %vm411 = vmand %vm397, %vm409
        %vm412 = vcmp.ge.s32.totalorder %v286, 0
        %v413 = vsel %vm412, 1, 0
        %v414 = vlaneseq
        %v415 = vshrl.u32 %v414, 7
        %v416 = vsub.s32 0, %v415
        %v417 = vrot.slane %v413, %v416
        %v418 = vlaneseq
        %v419 = vshrl.u32 %v418, 7
        %v420 = vsub.s32 1, %v419
        %v421 = vrot.slane %v413, %v420
        %vm422 = vcmp.ne.s32.totalorder %v417, 0
        %vm423 = vcmp.ne.s32.totalorder %v421, 0
        %vm424 = vmand %vm410, %vm422
        %vm425 = vmand %vm411, %vm423
        %vm426 = vcmp.lt.s32.totalorder %v286, 4
        %v427 = vsel %vm426, 1, 0
        %v428 = vlaneseq
        %v429 = vshrl.u32 %v428, 7
        %v430 = vsub.s32 0, %v429
        %v431 = vrot.slane %v427, %v430
        %v432 = vlaneseq
        %v433 = vshrl.u32 %v432, 7
        %v434 = vsub.s32 1, %v433
        %v435 = vrot.slane %v427, %v434
        %vm436 = vcmp.ne.s32.totalorder %v431, 0
        %vm437 = vcmp.ne.s32.totalorder %v435, 0
        %vm438 = vmand %vm424, %vm436
        %vm439 = vmand %vm425, %vm437
        %v440 = vld [vmem:[%s257] sm:$0x3]
        %v441 = vsub.f32 %v334, %v360
        %v442 = vsub.f32 %v335, %v367
        %v443 = vmul.f32 %v381, %v441
        %v444 = vmul.f32 %v388, %v442
        %v445 = vsel %vm438, %v443, 0.0
        %v446 = vsel %vm439, %v444, 0.0
        %v449 = vcombine.low %v445, %v446
        %v451 = vunpack.c.l.s4 1966171168
        %v452 = vunpack.c.0.s8 %v451
        %v453 = vlaneseq
        %v454 = vshrl.u32 %v453, 7
        %v455 = vsub.s32 %v452, %v454
        %v456 = vrot.slane %v449, %v455
        %v458 = vunpack.c.l.s4 1966171168
        %v459 = vunpack.c.0.s8 %v458
        %v460 = vlaneseq
        %v461 = vshrl.u32 %v460, 7
        %v462 = vsub.s32 %v459, %v461
        %v463 = vrot.slane %v456, %v462
        %v465 = vadd.f32 %v440, %v463
        %v466 = vlaneseq
        %vm467 = vcmp.ge.s32.totalorder %v466, 0
        %vm468 = vcmp.lt.s32.totalorder %v466, 256
        %vm469 = vmand %vm467, %vm468
        %470 = vst.msk [vmem:[%s257] sm:$0x3] %vm469, %v465
        %v471 = vld [vmem:[%s264] sm:$0x3]
        %v472 = vsel %vm438, %v381, 0.0
        %v473 = vsel %vm439, %v388, 0.0
        %v476 = vcombine.low %v472, %v473
        %v478 = vunpack.c.l.s4 1966171168
        %v479 = vunpack.c.0.s8 %v478
        %v480 = vlaneseq
        %v481 = vshrl.u32 %v480, 7
        %v482 = vsub.s32 %v479, %v481
        %v483 = vrot.slane %v476, %v482
        %v485 = vunpack.c.l.s4 1966171168
        %v486 = vunpack.c.0.s8 %v485
        %v487 = vlaneseq
        %v488 = vshrl.u32 %v487, 7
        %v489 = vsub.s32 %v486, %v488
        %v490 = vrot.slane %v483, %v489
        %v492 = vadd.f32 %v471, %v490
        %493 = vst.msk [vmem:[%s264] sm:$0x3] %vm469, %v492
        %s494 = sand.u32 %s122, 1
        %s495 = scalar_lea.sflag [#allocation4], %s494
        %s496 = sand.u32 %s122, 1
        %s497 = smul.addr %s496, 2
        %s498 = scalar_lea.vmem [#allocation5], %s497
        %s499 = sand.u32 %s148, 1
        %s500 = scalar_lea.sflag [#allocation7], %s499
        %s501 = sand.u32 %s148, 1
        %s502 = smul.addr %s501, 2
        %s503 = scalar_lea.vmem [#allocation6], %s502
        // Predicated region
        $region41: #{tpu_custom_call.1} parent=31 // pred_check
          %p504 = pneg %p132
        $region42: #{tpu_custom_call.1} parent=31 // pred_check_branch
          %506 = sbr.rel (%p504) target = $region44
        $region43: #{tpu_custom_call.1} parent=31 // pred_region
          %s508 = ssub.s32 32, 32
          %509 = vsyncadd %s495, %s508
          %s510 = smul.addr %s29, 2
          %s511 = smul.addr %s510, 16
          %s512 = scalar_lea.hbm %s3, %s511
          %s514 = sshll.u32 %s498, 4
          %s515 = int_to_ptr.vmem [resolvable:$true] %s514
          %517 = dma.vmem_to_hbm [thread:$0]  %s515, 32, %s512, %s495
        $region44: #{tpu_custom_call.1} parent=31 // pred_fallthru
          _
        // Predicated region
        $region45: #{tpu_custom_call.1} parent=31 // pred_check
          %p518 = pneg %p158
        $region46: #{tpu_custom_call.1} parent=31 // pred_check_branch
          %520 = sbr.rel (%p518) target = $region48
        $region47: #{tpu_custom_call.1} parent=31 // pred_region
          %s522 = ssub.s32 32, 32
          %523 = vsyncadd %s500, %s522
          %s524 = smul.addr %s29, 2
          %s525 = smul.addr %s524, 16
          %s526 = scalar_lea.hbm %s4, %s525
          %s528 = sshll.u32 %s503, 4
          %s529 = int_to_ptr.vmem [resolvable:$true] %s528
          %531 = dma.vmem_to_hbm [thread:$0]  %s529, 32, %s526, %s500
        $region48: #{tpu_custom_call.1} parent=31 // pred_fallthru
          _
      $region32: #{tpu_custom_call.1} parent=5 // pred_fallthru
        _
      %p532 = scmp.le.s32.totalorder 2, %s20
      // Predicated region
      $region49: #{tpu_custom_call.1} parent=5 // pred_check
        %p533 = pneg %p532
      $region50: #{tpu_custom_call.1} parent=5 // pred_check_branch
        %535 = sbr.rel (%p533) target = $region52
      $region51: #{tpu_custom_call.1} parent=5 // pred_region
        %s536 = ssub.s32 %s20, 2
        // Predicated region
        $region53: #{tpu_custom_call.1} parent=51 // pred_check
          %p537 = pneg %p138
        $region54: #{tpu_custom_call.1} parent=51 // pred_check_branch
          %539 = sbr.rel (%p537) target = $region56
        $region55: #{tpu_custom_call.1} parent=51 // pred_region
          %s540 = sand.u32 %s123, 1
          %s541 = scalar_lea.sflag [#allocation4], %s540
          %s542 = sand.u32 %s123, 1
          %s543 = smul.addr %s542, 2
          %s544 = scalar_lea.vmem [#allocation5], %s543
          %545 = dma.done %s541, 32
        $region56: #{tpu_custom_call.1} parent=51 // pred_fallthru
          _
        // Predicated region
        $region57: #{tpu_custom_call.1} parent=51 // pred_check
          %p546 = pneg %p164
        $region58: #{tpu_custom_call.1} parent=51 // pred_check_branch
          %548 = sbr.rel (%p546) target = $region60
        $region59: #{tpu_custom_call.1} parent=51 // pred_region
          %s549 = sand.u32 %s149, 1
          %s550 = scalar_lea.sflag [#allocation7], %s549
          %s551 = sand.u32 %s149, 1
          %s552 = smul.addr %s551, 2
          %s553 = scalar_lea.vmem [#allocation6], %s552
          %554 = dma.done %s550, 32
        $region60: #{tpu_custom_call.1} parent=51 // pred_fallthru
          _
      $region52: #{tpu_custom_call.1} parent=5 // pred_fallthru
        _
    $region6: #{tpu_custom_call.1} parent=1 // loop_footer
      %s24 = sadd.s32 1, %s20
    $region7: #{tpu_custom_call.1} parent=1 // loop_footer_branch
      %19 = sbr.rel target = $region3
    $region8: #{tpu_custom_call.1} parent=1 // loop_exit
      _
    %555 = vsyncpa [#allocation3], 1
    %s556 = scalar_lea.sflag [#allocation3], 1
    %557 = vsyncpa %s556, 1
    %558 = vsyncpa [#allocation4], 1
    %s559 = scalar_lea.sflag [#allocation4], 1
    %560 = vsyncpa %s559, 1
    %561 = vsyncpa [#allocation7], 1
    %s562 = scalar_lea.sflag [#allocation7], 1
    %563 = vsyncpa %s562, 1

</llo_original>
